<compile_context>
chip_gen: v7x
topology: tpu7x:2x2x1
jax: 0.10.0
libtpu: 0.0.40
codegen_flags: <defaults>
</compile_context>

<pallas_src>
import jax
import jax.numpy as jnp
from jax.experimental import pallas as pl
from jax.experimental.pallas import tpu as pltpu


def _round_up(n: int, m: int) -> int:
    return ((n + m - 1) // m) * m


def _round_down(n: int, m: int) -> int:
    return max((n // m) * m, m)


def mlp_kernel(x_ref, w1_ref, b1_ref, w2_ref, b2_ref, w3_ref, b3_ref,
               w4_ref, b4_ref, o_ref):
    # All four matmuls + bias + ReLU fused in VMEM (hidden dims 256/128/128 are
    # small, so every intermediate fits on-chip). MXU operands are bf16,
    # accumulation stays f32 via preferred_element_type.
    #
    # NOTE: every op here is row-independent. That is required for the clipped
    # final partial batch block (rows past B contain stale VMEM and are
    # discarded on writeback). Do NOT add any cross-row reduction here.
    h = x_ref[...].astype(jnp.bfloat16)

    h = jnp.dot(h, w1_ref[...], preferred_element_type=jnp.float32) + b1_ref[...]
    h = jnp.maximum(h, 0.0).astype(jnp.bfloat16)

    h = jnp.dot(h, w2_ref[...], preferred_element_type=jnp.float32) + b2_ref[...]
    h = jnp.maximum(h, 0.0).astype(jnp.bfloat16)

    h = jnp.dot(h, w3_ref[...], preferred_element_type=jnp.float32) + b3_ref[...]
    h = jnp.maximum(h, 0.0).astype(jnp.bfloat16)

    h = jnp.dot(h, w4_ref[...], preferred_element_type=jnp.float32) + b4_ref[...]

    o_ref[...] = h.astype(o_ref.dtype)


def _vmem_capacity_bytes() -> int:
    # Generation-aware VMEM capacity (v5e/v6e: 128 MiB, v7x: 64 MiB).
    try:
        return int(pltpu.get_tpu_info().vmem_capacity_bytes)
    except Exception:
        return 64 * 1024 * 1024  # conservative (v7x-sized) fallback


def simple_mlp_pallas(x, params, *, batch_tile=2048):
    """x: (B, in_dim) float32.  params: dict of pre-transposed (fan_in, fan_out)
    weights and (1, fan_out) biases in f32.  Returns (B, out_dim) f32."""
    B, in_dim = x.shape
    out_dim = params["w4"].shape[1]

    H1, H2, H3 = 256, 128, 128  # hidden-64 zero-padded to 128 (exact)

    # Weights in bf16 (MXU-native inputs, half the DMA bytes). Biases stay f32.
    # Zero-pad the 64-wide hidden layer to 128: padded pre-activations are
    # exactly 0 -> ReLU 0, and the padded w4 rows are 0, so the result is exact.
    w1 = params["w1"].astype(jnp.bfloat16)
    w2 = params["w2"].astype(jnp.bfloat16)
    w3 = jnp.pad(params["w3"], ((0, 0), (0, H3 - 64))).astype(jnp.bfloat16)
    w4 = jnp.pad(params["w4"], ((0, H3 - 64), (0, 0))).astype(jnp.bfloat16)
    b1, b2 = params["b1"], params["b2"]
    b3 = jnp.pad(params["b3"], ((0, 0), (0, H3 - 64)))
    b4 = params["b4"]

    # ---- generation-aware batch tile from a VMEM budget --------------------
    vmem_cap = _vmem_capacity_bytes()
    budget = int(0.70 * vmem_cap)  # ~45 MiB on v7x, ~90 MiB on v5e/v6e
    weight_bytes = (2 * 2 * (w1.size + w2.size + w3.size + w4.size)   # bf16, dbl-buf
                    + 2 * 4 * (b1.size + b2.size + b3.size + b4.size))  # f32, dbl-buf
    # per-row VMEM: double-buffered x/out tiles + live f32/bf16 intermediates
    row_bytes = (2 * 4 * in_dim + 2 * 4 * out_dim
                 + 4 * (H1 + H2 + H3 + out_dim)
                 + 2 * (in_dim + H1 + H2 + H3))
    bt_budget = max((budget - weight_bytes) // row_bytes, 8)

    bt = min(batch_tile, bt_budget, _round_up(B, 8))
    if B > bt:
        # Keep the grid >= 2 so the "parallel" batch axis shards across both
        # TensorCores on v7x (harmless on single-TC v5e/v6e).
        bt = min(bt, _round_up(pl.cdiv(B, 2), 8))
    bt = _round_down(bt, 8)

    # No wrapper-side batch padding: Pallas clips the partial final block.
    grid = (pl.cdiv(B, bt),)

    def resident(arr):
        # Whole-array block with constant index_map: effectively resident in
        # VMEM across the batch grid (no per-step re-fetch of weights).
        return pl.BlockSpec(arr.shape, lambda i: (0, 0))

    # Advisory cost hint so XLA schedules surrounding ops around the kernel.
    flops = 2 * B * (in_dim * H1 + H1 * H2 + H2 * H3 + H3 * out_dim)
    bytes_accessed = (B * in_dim * 4 + B * out_dim * 4
                      + (w1.size + w2.size + w3.size + w4.size) * 2
                      + (b1.size + b2.size + b3.size + b4.size) * 4)
    cost = pl.CostEstimate(flops=flops, transcendentals=0,
                           bytes_accessed=bytes_accessed)

    # Generation-aware scoped-VMEM limit: headroom above the estimate, capped
    # at ~0.75 of the physical VMEM of the chip we are actually running on.
    vmem_est = weight_bytes + bt * row_bytes
    vmem_limit = int(min(max(2 * vmem_est, 32 * 1024 * 1024),
                         int(0.75 * vmem_cap)))

    out = pl.pallas_call(
        mlp_kernel,
        out_shape=jax.ShapeDtypeStruct((B, out_dim), x.dtype),
        grid=grid,
        in_specs=[
            pl.BlockSpec((bt, in_dim), lambda i: (i, 0)),   # streaming x tile
            resident(w1), resident(b1),
            resident(w2), resident(b2),
            resident(w3), resident(b3),
            resident(w4), resident(b4),
        ],
        # Last dim equals the full array dim (legal); no column padding/slice.
        out_specs=pl.BlockSpec((bt, out_dim), lambda i: (i, 0)),
        compiler_params=pltpu.CompilerParams(
            dimension_semantics=("parallel",),
            vmem_limit_bytes=vmem_limit),
        cost_estimate=cost,
    )(x, w1, b1, w2, b2, w3, b3, w4, b4)

    return out


def init_params(key, in_dim, out_dim):
    """Deterministic init mimicking PyTorch Linear default:
    U(-1/sqrt(fan_in), +1/sqrt(fan_in)). Weights stored (fan_in, fan_out),
    i.e. already transposed for x @ W (== x @ W_torch.T)."""
    dims = [(in_dim, 256), (256, 128), (128, 64), (64, out_dim)]
    params = {}
    for idx, (fi, fo) in enumerate(dims, start=1):
        key, kw, kb = jax.random.split(key, 3)
        bound = 1.0 / jnp.sqrt(jnp.float32(fi))
        params[f"w{idx}"] = jax.random.uniform(
            kw, (fi, fo), jnp.float32, minval=-bound, maxval=bound)
        # bias kept 2D (1, fo) so every kernel operand is >= 2D on TPU
        params[f"b{idx}"] = jax.random.uniform(
            kb, (1, fo), jnp.float32, minval=-bound, maxval=bound)
    return params


def mlp_reference(x, p):
    # Pure f32 reference (PyTorch-equivalent forward pass).
    h = jnp.maximum(x @ p["w1"] + p["b1"], 0.0)
    h = jnp.maximum(h @ p["w2"] + p["b2"], 0.0)
    h = jnp.maximum(h @ p["w3"] + p["b3"], 0.0)
    return h @ p["w4"] + p["b4"]


if __name__ == "__main__":
    key = jax.random.PRNGKey(0)
    key, kx, kx2 = jax.random.split(key, 3)

    batch, in_dim, out_dim = 8, 32, 16
    x = jax.random.normal(kx, (batch, in_dim), jnp.float32)
    params = init_params(key, in_dim, out_dim)

    out = simple_mlp_pallas(x, params)
    out = jax.block_until_ready(out)
    ref = mlp_reference(x, params)
    assert out.shape == (batch, out_dim)
    # bf16 matmul inputs (f32 accumulation) -> relaxed tolerance vs f32 reference.
    assert jnp.allclose(out, ref, atol=1e-2, rtol=2e-2), (
        f"mismatch vs reference, max abs diff {jnp.max(jnp.abs(out - ref))}")

    # Exercise the multi-step grid + clipped partial final block path (B=300,
    # bt=128 -> grid=3, last block has 44 valid rows).
    batch2 = 300
    x2 = jax.random.normal(kx2, (batch2, in_dim), jnp.float32)
    out2 = jax.block_until_ready(simple_mlp_pallas(x2, params, batch_tile=128))
    ref2 = mlp_reference(x2, params)
    assert out2.shape == (batch2, out_dim)
    assert jnp.allclose(out2, ref2, atol=1e-2, rtol=2e-2), (
        f"ragged-batch mismatch, max abs diff {jnp.max(jnp.abs(out2 - ref2))}")

    print("KERNEL_OK")
</pallas_src>

<mosaic_0001>
module attributes {stable_mosaic.version = 11 : i64} {
  func.func @mlp_kernel(%arg0: i32, %arg1: memref<8x32xf32, #tpu.memory_space<vmem>>, %arg2: memref<32x256xbf16, #tpu.memory_space<vmem>>, %arg3: memref<1x256xf32, #tpu.memory_space<vmem>>, %arg4: memref<256x128xbf16, #tpu.memory_space<vmem>>, %arg5: memref<1x128xf32, #tpu.memory_space<vmem>>, %arg6: memref<128x128xbf16, #tpu.memory_space<vmem>>, %arg7: memref<1x128xf32, #tpu.memory_space<vmem>>, %arg8: memref<128x16xbf16, #tpu.memory_space<vmem>>, %arg9: memref<1x16xf32, #tpu.memory_space<vmem>>, %arg10: memref<8x16xf32, #tpu.memory_space<vmem>>) attributes {dimension_semantics = [#tpu.dimension_semantics<parallel>], iteration_bounds = array<i64: 1>, scalar_prefetch = 0 : i64, scratch_operands = 0 : i64, tpu.core_type = #tpu.core_type<tc>, window_params = [{transform_indices = @transform_0, window_bounds = array<i64: 8, 32>}, {pipeline_mode = #tpu.pipeline_mode<synchronous>, transform_indices = @transform_1, window_bounds = array<i64: 32, 256>}, {pipeline_mode = #tpu.pipeline_mode<synchronous>, transform_indices = @transform_2, window_bounds = array<i64: 1, 256>}, {pipeline_mode = #tpu.pipeline_mode<synchronous>, transform_indices = @transform_3, window_bounds = array<i64: 256, 128>}, {pipeline_mode = #tpu.pipeline_mode<synchronous>, transform_indices = @transform_4, window_bounds = array<i64: 1, 128>}, {pipeline_mode = #tpu.pipeline_mode<synchronous>, transform_indices = @transform_5, window_bounds = array<i64: 128, 128>}, {pipeline_mode = #tpu.pipeline_mode<synchronous>, transform_indices = @transform_6, window_bounds = array<i64: 1, 128>}, {pipeline_mode = #tpu.pipeline_mode<synchronous>, transform_indices = @transform_7, window_bounds = array<i64: 128, 16>}, {pipeline_mode = #tpu.pipeline_mode<synchronous>, transform_indices = @transform_8, window_bounds = array<i64: 1, 16>}, {transform_indices = @transform_9, window_bounds = array<i64: 8, 16>}]} {
    %c0 = arith.constant 0 : index
    %c0_0 = arith.constant 0 : index
    %0 = vector.load %arg1[%c0, %c0_0] : memref<8x32xf32, #tpu.memory_space<vmem>>, vector<8x32xf32>
    %1 = arith.truncf %0 : vector<8x32xf32> to vector<8x32xbf16>
    %c0_1 = arith.constant 0 : index
    %c0_2 = arith.constant 0 : index
    %2 = vector.load %arg2[%c0_1, %c0_2] : memref<32x256xbf16, #tpu.memory_space<vmem>>, vector<32x256xbf16>
    %cst = arith.constant dense<0.000000e+00> : vector<8x256xf32>
    %3 = tpu.matmul %1, %2, %cst {dimension_numbers = #tpu.dot_dimension_numbers<[1], [0], [0], [1], [0, 0, 1, 1], [], []>} : vector<8x32xbf16>, vector<32x256xbf16>, vector<8x256xf32> -> vector<8x256xf32>
    %c0_3 = arith.constant 0 : index
    %c0_4 = arith.constant 0 : index
    %4 = vector.load %arg3[%c0_3, %c0_4] : memref<1x256xf32, #tpu.memory_space<vmem>>, vector<1x256xf32>
    %5 = vector.broadcast %4 : vector<1x256xf32> to vector<8x256xf32>
    %6 = arith.addf %3, %5 : vector<8x256xf32>
    %cst_5 = arith.constant 0.000000e+00 : f32
    %7 = vector.broadcast %cst_5 : f32 to vector<8x256xf32>
    %8 = arith.maximumf %6, %7 : vector<8x256xf32>
    %9 = arith.truncf %8 : vector<8x256xf32> to vector<8x256xbf16>
    %c0_6 = arith.constant 0 : index
    %c0_7 = arith.constant 0 : index
    %10 = vector.load %arg4[%c0_6, %c0_7] : memref<256x128xbf16, #tpu.memory_space<vmem>>, vector<256x128xbf16>
    %cst_8 = arith.constant dense<0.000000e+00> : vector<8x128xf32>
    %11 = tpu.matmul %9, %10, %cst_8 {dimension_numbers = #tpu.dot_dimension_numbers<[1], [0], [0], [1], [0, 0, 1, 1], [], []>} : vector<8x256xbf16>, vector<256x128xbf16>, vector<8x128xf32> -> vector<8x128xf32>
    %c0_9 = arith.constant 0 : index
    %c0_10 = arith.constant 0 : index
    %12 = vector.load %arg5[%c0_9, %c0_10] : memref<1x128xf32, #tpu.memory_space<vmem>>, vector<1x128xf32>
    %13 = vector.broadcast %12 : vector<1x128xf32> to vector<8x128xf32>
    %14 = arith.addf %11, %13 : vector<8x128xf32>
    %cst_11 = arith.constant 0.000000e+00 : f32
    %15 = vector.broadcast %cst_11 : f32 to vector<8x128xf32>
    %16 = arith.maximumf %14, %15 : vector<8x128xf32>
    %17 = arith.truncf %16 : vector<8x128xf32> to vector<8x128xbf16>
    %c0_12 = arith.constant 0 : index
    %c0_13 = arith.constant 0 : index
    %18 = vector.load %arg6[%c0_12, %c0_13] : memref<128x128xbf16, #tpu.memory_space<vmem>>, vector<128x128xbf16>
    %cst_14 = arith.constant dense<0.000000e+00> : vector<8x128xf32>
    %19 = tpu.matmul %17, %18, %cst_14 {dimension_numbers = #tpu.dot_dimension_numbers<[1], [0], [0], [1], [0, 0, 1, 1], [], []>} : vector<8x128xbf16>, vector<128x128xbf16>, vector<8x128xf32> -> vector<8x128xf32>
    %c0_15 = arith.constant 0 : index
    %c0_16 = arith.constant 0 : index
    %20 = vector.load %arg7[%c0_15, %c0_16] : memref<1x128xf32, #tpu.memory_space<vmem>>, vector<1x128xf32>
    %21 = vector.broadcast %20 : vector<1x128xf32> to vector<8x128xf32>
    %22 = arith.addf %19, %21 : vector<8x128xf32>
    %cst_17 = arith.constant 0.000000e+00 : f32
    %23 = vector.broadcast %cst_17 : f32 to vector<8x128xf32>
    %24 = arith.maximumf %22, %23 : vector<8x128xf32>
    %25 = arith.truncf %24 : vector<8x128xf32> to vector<8x128xbf16>
    %c0_18 = arith.constant 0 : index
    %c0_19 = arith.constant 0 : index
    %26 = vector.load %arg8[%c0_18, %c0_19] : memref<128x16xbf16, #tpu.memory_space<vmem>>, vector<128x16xbf16>
    %cst_20 = arith.constant dense<0.000000e+00> : vector<8x16xf32>
    %27 = tpu.matmul %25, %26, %cst_20 {dimension_numbers = #tpu.dot_dimension_numbers<[1], [0], [0], [1], [0, 0, 1, 1], [], []>} : vector<8x128xbf16>, vector<128x16xbf16>, vector<8x16xf32> -> vector<8x16xf32>
    %c0_21 = arith.constant 0 : index
    %c0_22 = arith.constant 0 : index
    %28 = vector.load %arg9[%c0_21, %c0_22] : memref<1x16xf32, #tpu.memory_space<vmem>>, vector<1x16xf32>
    %29 = vector.broadcast %28 : vector<1x16xf32> to vector<8x16xf32>
    %30 = arith.addf %27, %29 : vector<8x16xf32>
    %c0_23 = arith.constant 0 : index
    %c0_24 = arith.constant 0 : index
    %31 = vector.load %arg10[%c0_23, %c0_24] : memref<8x16xf32, #tpu.memory_space<vmem>>, vector<8x16xf32>
    tpu.vector_store %arg10[%c0_23, %c0_24], %30 {strides = array<i32>} : memref<8x16xf32, #tpu.memory_space<vmem>>, vector<8x16xf32>,
    return
  }
  func.func @transform_0(%arg0: i32) -> (i32, i32) {
    %c0_i32 = arith.constant 0 : i32
    %c0_i32_0 = arith.constant 0 : i32
    return %arg0, %c0_i32 : i32, i32
  }
  func.func @transform_1(%arg0: i32) -> (i32, i32) {
    %c0_i32 = arith.constant 0 : i32
    %c0_i32_0 = arith.constant 0 : i32
    %c0_i32_1 = arith.constant 0 : i32
    return %c0_i32, %c0_i32_0 : i32, i32
  }
  func.func @transform_2(%arg0: i32) -> (i32, i32) {
    %c0_i32 = arith.constant 0 : i32
    %c0_i32_0 = arith.constant 0 : i32
    %c0_i32_1 = arith.constant 0 : i32
    return %c0_i32, %c0_i32_0 : i32, i32
  }
  func.func @transform_3(%arg0: i32) -> (i32, i32) {
    %c0_i32 = arith.constant 0 : i32
    %c0_i32_0 = arith.constant 0 : i32
    %c0_i32_1 = arith.constant 0 : i32
    return %c0_i32, %c0_i32_0 : i32, i32
  }
  func.func @transform_4(%arg0: i32) -> (i32, i32) {
    %c0_i32 = arith.constant 0 : i32
    %c0_i32_0 = arith.constant 0 : i32
    %c0_i32_1 = arith.constant 0 : i32
    return %c0_i32, %c0_i32_0 : i32, i32
  }
  func.func @transform_5(%arg0: i32) -> (i32, i32) {
    %c0_i32 = arith.constant 0 : i32
    %c0_i32_0 = arith.constant 0 : i32
    %c0_i32_1 = arith.constant 0 : i32
    return %c0_i32, %c0_i32_0 : i32, i32
  }
  func.func @transform_6(%arg0: i32) -> (i32, i32) {
    %c0_i32 = arith.constant 0 : i32
    %c0_i32_0 = arith.constant 0 : i32
    %c0_i32_1 = arith.constant 0 : i32
    return %c0_i32, %c0_i32_0 : i32, i32
  }
  func.func @transform_7(%arg0: i32) -> (i32, i32) {
    %c0_i32 = arith.constant 0 : i32
    %c0_i32_0 = arith.constant 0 : i32
    %c0_i32_1 = arith.constant 0 : i32
    return %c0_i32, %c0_i32_0 : i32, i32
  }
  func.func @transform_8(%arg0: i32) -> (i32, i32) {
    %c0_i32 = arith.constant 0 : i32
    %c0_i32_0 = arith.constant 0 : i32
    %c0_i32_1 = arith.constant 0 : i32
    return %c0_i32, %c0_i32_0 : i32, i32
  }
  func.func @transform_9(%arg0: i32) -> (i32, i32) {
    %c0_i32 = arith.constant 0 : i32
    %c0_i32_0 = arith.constant 0 : i32
    return %arg0, %c0_i32 : i32, i32
  }
}

</mosaic_0001>

<llo_original>
// kernel: tpu_custom_call.1
$region0: #{tpu_custom_call.1}
  #allocation0 [shape = 'u32[]', space=smem, size = 0x4, offset = 0x4, fixed_abs, tag = 'smem constant byte address 0x4 - core index']
  #allocation1 [shape = 'u32[144,128]{1,0:T(1,128)}', space=vmem, size = 0x12000, scoped, tag = 'internal scratch']
  %s0 = inlined_call_operand.vmem [shape: f32[8,32], index: 0, kind: input, shape index: {}]
  %s1 = inlined_call_operand.hbm [shape: bf16[32,256], index: 1, kind: input, shape index: {}]
  %s2 = inlined_call_operand.vmem [shape: f32[1,256], index: 2, kind: input, shape index: {}]
  %s3 = inlined_call_operand.hbm [shape: bf16[256,128], index: 3, kind: input, shape index: {}]
  %s4 = inlined_call_operand.vmem [shape: f32[1,128], index: 4, kind: input, shape index: {}]
  %s5 = inlined_call_operand.vmem [shape: bf16[128,128], index: 5, kind: input, shape index: {}]
  %s6 = inlined_call_operand.vmem [shape: f32[1,128], index: 6, kind: input, shape index: {}]
  %s7 = inlined_call_operand.vmem [shape: bf16[128,16], index: 7, kind: input, shape index: {}]
  %s8 = inlined_call_operand.vmem [shape: f32[1,16], index: 8, kind: input, shape index: {}]
  %s9 = inlined_call_operand.hbm [shape: f32[8,16], index: 9, kind: output, shape index: {}]
  %s10 = sld [smem:[#allocation0]]
  $region54: #{tpu_custom_call.1} parent=0
    _
  %s12 = ssub.s32 1, %s10
  %s13 = scalar_select 0, %s12, %s10
  $region1: #{tpu_custom_call.1} parent=0
    #allocation2 [shape = 'u8[16384]{0}', space=vmem, size = 0x4000, scoped, tag = 'input window, operand 1, single buffered']
    #allocation3 [shape = 's32[1]{0}', space=sflag, size = 0x4, scoped, tag = 'scoped memory for tpu_custom_call.1']
    #allocation4 [shape = 's32[1]{0}', space=sflag, size = 0x4, scoped, tag = 'scoped memory for tpu_custom_call.1']
    #allocation5 [shape = 'u8[65536]{0}', space=vmem, size = 0x10000, scoped, tag = 'input window, operand 3, single buffered']
    #allocation6 [shape = 's32[1]{0}', space=sflag, size = 0x4, scoped, tag = 'scoped memory for tpu_custom_call.1']
    #allocation7 [shape = 'u8[4096]{0}', space=vmem, size = 0x1000, scoped, tag = 'output window, operand 0, single buffered']
    %14 = vsyncpa [#allocation3], 0
    %15 = vsyncpa [#allocation6], 0
    %16 = vsyncpa [#allocation4], 0
    // Predicated region
    $region2: #{tpu_custom_call.1} parent=1 // pred_check
      _
    $region3: #{tpu_custom_call.1} parent=1 // pred_check_branch
      %18 = sbr.rel (0) target = $region5
    $region4: #{tpu_custom_call.1} parent=1 // pred_region
      _
    $region5: #{tpu_custom_call.1} parent=1 // pred_fallthru
      _
    // Predicated region
    $region6: #{tpu_custom_call.1} parent=1 // pred_check
      _
    $region7: #{tpu_custom_call.1} parent=1 // pred_check_branch
      %20 = sbr.rel (0) target = $region9
    $region8: #{tpu_custom_call.1} parent=1 // pred_region
      %s22 = ssub.s32 512, 512
      %23 = vsyncadd [#allocation3], %s22
      %s24 = sshll.u32 [#allocation2], 4
      %s25 = int_to_ptr.vmem [resolvable:$true] %s24
      %30 = dma.hbm_to_vmem [thread:$0]  %s1, 512, %s25, [#allocation3], 128, 128, 8
    $region9: #{tpu_custom_call.1} parent=1 // pred_fallthru
      _
    // Predicated region
    $region10: #{tpu_custom_call.1} parent=1 // pred_check
      _
    $region11: #{tpu_custom_call.1} parent=1 // pred_check_branch
      %32 = sbr.rel (0) target = $region13
    $region12: #{tpu_custom_call.1} parent=1 // pred_region
      _
    $region13: #{tpu_custom_call.1} parent=1 // pred_fallthru
      _
    // Predicated region
    $region14: #{tpu_custom_call.1} parent=1 // pred_check
      _
    $region15: #{tpu_custom_call.1} parent=1 // pred_check_branch
      %34 = sbr.rel (0) target = $region17
    $region16: #{tpu_custom_call.1} parent=1 // pred_region
      %s36 = ssub.s32 2048, 2048
      %37 = vsyncadd [#allocation6], %s36
      %s38 = sshll.u32 [#allocation5], 4
      %s39 = int_to_ptr.vmem [resolvable:$true] %s38
      %44 = dma.hbm_to_vmem [thread:$0]  %s3, 2048, %s39, [#allocation6], 64, 64, 4
    $region17: #{tpu_custom_call.1} parent=1 // pred_fallthru
      _
    // Predicated region
    $region18: #{tpu_custom_call.1} parent=1 // pred_check
      _
    $region19: #{tpu_custom_call.1} parent=1 // pred_check_branch
      %46 = sbr.rel (0) target = $region21
    $region20: #{tpu_custom_call.1} parent=1 // pred_region
      _
    $region21: #{tpu_custom_call.1} parent=1 // pred_fallthru
      _
    // Predicated region
    $region22: #{tpu_custom_call.1} parent=1 // pred_check
      _
    $region23: #{tpu_custom_call.1} parent=1 // pred_check_branch
      %48 = sbr.rel (0) target = $region25
    $region24: #{tpu_custom_call.1} parent=1 // pred_region
      _
    $region25: #{tpu_custom_call.1} parent=1 // pred_fallthru
      _
    // Predicated region
    $region26: #{tpu_custom_call.1} parent=1 // pred_check
      _
    $region27: #{tpu_custom_call.1} parent=1 // pred_check_branch
      %50 = sbr.rel (0) target = $region29
    $region28: #{tpu_custom_call.1} parent=1 // pred_region
      _
    $region29: #{tpu_custom_call.1} parent=1 // pred_fallthru
      _
    // Predicated region
    $region30: #{tpu_custom_call.1} parent=1 // pred_check
      _
    $region31: #{tpu_custom_call.1} parent=1 // pred_check_branch
      %52 = sbr.rel (0) target = $region33
    $region32: #{tpu_custom_call.1} parent=1 // pred_region
      _
    $region33: #{tpu_custom_call.1} parent=1 // pred_fallthru
      _
    // Predicated region
    $region34: #{tpu_custom_call.1} parent=1 // pred_check
      _
    $region35: #{tpu_custom_call.1} parent=1 // pred_check_branch
      %54 = sbr.rel (0) target = $region37
    $region36: #{tpu_custom_call.1} parent=1 // pred_region
      _
    $region37: #{tpu_custom_call.1} parent=1 // pred_fallthru
      _
    // Predicated region
    $region38: #{tpu_custom_call.1} parent=1 // pred_check
      _
    $region39: #{tpu_custom_call.1} parent=1 // pred_check_branch
      %56 = sbr.rel (0) target = $region41
    $region40: #{tpu_custom_call.1} parent=1 // pred_region
      %57 = dma.done [#allocation3], 512
    $region41: #{tpu_custom_call.1} parent=1 // pred_fallthru
      _
    // Predicated region
    $region42: #{tpu_custom_call.1} parent=1 // pred_check
      _
    $region43: #{tpu_custom_call.1} parent=1 // pred_check_branch
      %59 = sbr.rel (0) target = $region45
    $region44: #{tpu_custom_call.1} parent=1 // pred_region
      %60 = dma.done [#allocation6], 2048
    $region45: #{tpu_custom_call.1} parent=1 // pred_fallthru
      _
    %v62 = vld [vmem:[%s0] sm:$0xff]
    %v63 = vpack.c.bf16 %v62, %v62
    %v64 = vld [vmem:[#allocation2] sm:$0xff]
    %v65 = vld [vmem:[#allocation2 + $0x8] sm:$0xff]
    %v66 = vld [vmem:[#allocation2 + $0x10] sm:$0xff]
    %v67 = vld [vmem:[#allocation2 + $0x18] sm:$0xff]
    %v68 = vld [vmem:[%s2] sm:$0x3]
    %v70 = vlaneseq
    %v71 = vshrl.u32 %v70, 7
    %v72 = vsub.s32 0, %v71
    %v73 = vrot.slane %v68, %v72
    %v74 = vlaneseq
    %v75 = vshrl.u32 %v74, 7
    %v76 = vsub.s32 1, %v75
    %v77 = vrot.slane %v68, %v76
    %v84 = vunpack.c.l.b16 %v64
    %v85 = vunpack.c.h.b16 %v64
    %v86 = vunpack.c.l.b16 %v65
    %v87 = vunpack.c.h.b16 %v65
    %v88 = vunpack.c.l.b16 %v66
    %v89 = vunpack.c.h.b16 %v66
    %v90 = vunpack.c.l.b16 %v67
    %v91 = vunpack.c.h.b16 %v67
    %v92 = vpack.c.b16 %v86, %v84
    %v93 = vpack.c.b16 %v87, %v85
    %v94 = vpack.c.b16 %v90, %v88
    %v95 = vpack.c.b16 %v91, %v89
    %vm100 = vcmask 261120
    %v102 = vsel %vm100, %v63, 0
    %104 = vmatprep.subr.bf16.mxu0 %v93
    %105 = vmatpush1.bf16.msra.mxu0 %v92
    %106 = vmatprep.subr.bf16.mxu0 %v95
    %107 = vmatpush1.bf16.msra.mxu0 %v94
    %108 = vmatprep.subr.bf16.mxu0 0
    %109 = vmatpush1.bf16.msra.mxu0 0
    %110 = vmatprep.subr.bf16.mxu0 0
    %111 = vmatpush1.bf16.msra.mxu0 0
    %112 = vmatprep.subr.bf16.mxu0 0
    %113 = vmatpush1.bf16.msra.mxu0 0
    %114 = vmatprep.subr.bf16.mxu0 0
    %115 = vmatpush1.bf16.msra.mxu0 0
    %116 = vmatprep.subr.bf16.mxu0 0
    %117 = vmatpush1.bf16.msra.mxu0 0
    %118 = vmatprep.subr.bf16.mxu0 0
    %119 = vmatpush1.bf16.msra.mxu0 0
    %120 = vmatprep.subr.bf16.mxu0 0
    %121 = vmatpush1.bf16.msra.mxu0 0
    %122 = vmatprep.subr.bf16.mxu0 0
    %123 = vmatpush1.bf16.msra.mxu0 0
    %124 = vmatprep.subr.bf16.mxu0 0
    %125 = vmatpush1.bf16.msra.mxu0 0
    %126 = vmatprep.subr.bf16.mxu0 0
    %127 = vmatpush1.bf16.msra.mxu0 0
    %128 = vmatprep.subr.bf16.mxu0 0
    %129 = vmatpush1.bf16.msra.mxu0 0
    %130 = vmatprep.subr.bf16.mxu0 0
    %131 = vmatpush1.bf16.msra.mxu0 0
    %132 = vmatprep.subr.bf16.mxu0 0
    %133 = vmatpush1.bf16.msra.mxu0 0
    %134 = vmatprep.subr.bf16.mxu0 0
    %135 = vmatpush1.bf16.msra.mxu0 0
    %136 = vmatprep.mubr.bf16.mxu0 0
    %137 = vmatmul.mubr.bf16.gmra.mrb[0].mxu0 %v102
    %v138 = vpop.f32.mrb[0].mxu0
    %v139 = vadd.f32 %v73, %v138
    %v140 = vpop.f32.mrb[0].mxu0
    %v141 = vadd.f32 %v77, %v140
    %v142 = vpop.f32.mrb[0].mxu0
    %v143 = vpop.f32.mrb[0].mxu0
    %144 = vdwg.mxu0
    %v145 = vmax.f32 %v139, 0.0
    %v146 = vmax.f32 %v141, 0.0
    %v147 = vpack.c.bf16 %v145, %v145
    %v148 = vpack.c.bf16 %v146, %v146
    %v149 = vld [vmem:[#allocation5] sm:$0xf]
    %v150 = vld [vmem:[#allocation5 + $0x4] sm:$0xf]
    %v151 = vld [vmem:[#allocation5 + $0x8] sm:$0xf]
    %v152 = vld [vmem:[#allocation5 + $0xc] sm:$0xf]
    %v153 = vld [vmem:[#allocation5 + $0x10] sm:$0xf]
    %v154 = vld [vmem:[#allocation5 + $0x14] sm:$0xf]
    %v155 = vld [vmem:[#allocation5 + $0x18] sm:$0xf]
    %v156 = vld [vmem:[#allocation5 + $0x1c] sm:$0xf]
    %v157 = vld [vmem:[#allocation5 + $0x20] sm:$0xf]
    %v158 = vld [vmem:[#allocation5 + $0x24] sm:$0xf]
    %v159 = vld [vmem:[#allocation5 + $0x28] sm:$0xf]
    %v160 = vld [vmem:[#allocation5 + $0x2c] sm:$0xf]
    %v161 = vld [vmem:[#allocation5 + $0x30] sm:$0xf]
    %v162 = vld [vmem:[#allocation5 + $0x34] sm:$0xf]
    %v163 = vld [vmem:[#allocation5 + $0x38] sm:$0xf]
    %v164 = vld [vmem:[#allocation5 + $0x3c] sm:$0xf]
    %v165 = vld [vmem:[#allocation5 + $0x40] sm:$0xf]
    %v166 = vld [vmem:[#allocation5 + $0x44] sm:$0xf]
    %v167 = vld [vmem:[#allocation5 + $0x48] sm:$0xf]
    %v168 = vld [vmem:[#allocation5 + $0x4c] sm:$0xf]
    %v169 = vld [vmem:[#allocation5 + $0x50] sm:$0xf]
    %v170 = vld [vmem:[#allocation5 + $0x54] sm:$0xf]
    %v171 = vld [vmem:[#allocation5 + $0x58] sm:$0xf]
    %v172 = vld [vmem:[#allocation5 + $0x5c] sm:$0xf]
    %v173 = vld [vmem:[#allocation5 + $0x60] sm:$0xf]
    %v174 = vld [vmem:[#allocation5 + $0x64] sm:$0xf]
    %v175 = vld [vmem:[#allocation5 + $0x68] sm:$0xf]
    %v176 = vld [vmem:[#allocation5 + $0x6c] sm:$0xf]
    %v177 = vld [vmem:[#allocation5 + $0x70] sm:$0xf]
    %v178 = vld [vmem:[#allocation5 + $0x74] sm:$0xf]
    %v179 = vld [vmem:[#allocation5 + $0x78] sm:$0xf]
    %v180 = vld [vmem:[#allocation5 + $0x7c] sm:$0xf]
    %v181 = vld [vmem:[%s4] sm:$0x1]
    %v183 = vlaneseq
    %v184 = vshrl.u32 %v183, 7
    %v185 = vsub.s32 0, %v184
    %v186 = vrot.slane %v181, %v185
    %v220 = vunpack.c.l.b16 %v149
    %v221 = vunpack.c.l.b16 %v150
    %v222 = vunpack.c.l.b16 %v151
    %v223 = vunpack.c.l.b16 %v152
    %v224 = vunpack.c.l.b16 %v153
    %v225 = vunpack.c.l.b16 %v154
    %v226 = vunpack.c.l.b16 %v155
    %v227 = vunpack.c.l.b16 %v156
    %v228 = vunpack.c.l.b16 %v157
    %v229 = vunpack.c.l.b16 %v158
    %v230 = vunpack.c.l.b16 %v159
    %v231 = vunpack.c.l.b16 %v160
    %v232 = vunpack.c.l.b16 %v161
    %v233 = vunpack.c.l.b16 %v162
    %v234 = vunpack.c.l.b16 %v163
    %v235 = vunpack.c.l.b16 %v164
    %v236 = vunpack.c.l.b16 %v165
    %v237 = vunpack.c.l.b16 %v166
    %v238 = vunpack.c.l.b16 %v167
    %v239 = vunpack.c.l.b16 %v168
    %v240 = vunpack.c.l.b16 %v169
    %v241 = vunpack.c.l.b16 %v170
    %v242 = vunpack.c.l.b16 %v171
    %v243 = vunpack.c.l.b16 %v172
    %v244 = vunpack.c.l.b16 %v173
    %v245 = vunpack.c.l.b16 %v174
    %v246 = vunpack.c.l.b16 %v175
    %v247 = vunpack.c.l.b16 %v176
    %v248 = vunpack.c.l.b16 %v177
    %v249 = vunpack.c.l.b16 %v178
    %v250 = vunpack.c.l.b16 %v179
    %v251 = vunpack.c.l.b16 %v180
    %v252 = vpack.c.b16 %v221, %v220
    %v253 = vpack.c.b16 %v223, %v222
    %v254 = vpack.c.b16 %v225, %v224
    %v255 = vpack.c.b16 %v227, %v226
    %v256 = vpack.c.b16 %v229, %v228
    %v257 = vpack.c.b16 %v231, %v230
    %v258 = vpack.c.b16 %v233, %v232
    %v259 = vpack.c.b16 %v235, %v234
    %v260 = vpack.c.b16 %v237, %v236
    %v261 = vpack.c.b16 %v239, %v238
    %v262 = vpack.c.b16 %v241, %v240
    %v263 = vpack.c.b16 %v243, %v242
    %v264 = vpack.c.b16 %v245, %v244
    %v265 = vpack.c.b16 %v247, %v246
    %v266 = vpack.c.b16 %v249, %v248
    %v267 = vpack.c.b16 %v251, %v250
    %284 = vmatprep.subr.bf16.mxu0 0
    %285 = vmatpush1.bf16.msra.mxu0 %v252
    %286 = vmatprep.subr.bf16.mxu0 0
    %287 = vmatpush1.bf16.msra.mxu0 %v253
    %288 = vmatprep.subr.bf16.mxu0 0
    %289 = vmatpush1.bf16.msra.mxu0 %v254
    %290 = vmatprep.subr.bf16.mxu0 0
    %291 = vmatpush1.bf16.msra.mxu0 %v255
    %292 = vmatprep.subr.bf16.mxu0 0
    %293 = vmatpush1.bf16.msra.mxu0 %v256
    %294 = vmatprep.subr.bf16.mxu0 0
    %295 = vmatpush1.bf16.msra.mxu0 %v257
    %296 = vmatprep.subr.bf16.mxu0 0
    %297 = vmatpush1.bf16.msra.mxu0 %v258
    %298 = vmatprep.subr.bf16.mxu0 0
    %299 = vmatpush1.bf16.msra.mxu0 %v259
    %300 = vmatprep.subr.bf16.mxu0 0
    %301 = vmatpush1.bf16.msra.mxu0 %v260
    %302 = vmatprep.subr.bf16.mxu0 0
    %303 = vmatpush1.bf16.msra.mxu0 %v261
    %304 = vmatprep.subr.bf16.mxu0 0
    %305 = vmatpush1.bf16.msra.mxu0 %v262
    %306 = vmatprep.subr.bf16.mxu0 0
    %307 = vmatpush1.bf16.msra.mxu0 %v263
    %308 = vmatprep.subr.bf16.mxu0 0
    %309 = vmatpush1.bf16.msra.mxu0 %v264
    %310 = vmatprep.subr.bf16.mxu0 0
    %311 = vmatpush1.bf16.msra.mxu0 %v265
    %312 = vmatprep.subr.bf16.mxu0 0
    %313 = vmatpush1.bf16.msra.mxu0 %v266
    %314 = vmatprep.subr.bf16.mxu0 0
    %315 = vmatpush1.bf16.msra.mxu0 %v267
    %316 = vmatprep.mubr.bf16.mxu0 %v148
    %317 = vmatmul.mubr.bf16.gmra.mrb[0].mxu0 %v147
    %v318 = vpop.f32.mrb[0].mxu0
    %v319 = vadd.f32 %v186, %v318
    %v320 = vpop.f32.mrb[0].mxu0
    %v321 = vpop.f32.mrb[0].mxu0
    %v322 = vpop.f32.mrb[0].mxu0
    %323 = vdwg.mxu0
    %v324 = vmax.f32 %v319, 0.0
    %v325 = vpack.c.bf16 %v324, %v324
    %v326 = vld [vmem:[%s5] sm:$0xf]
    %v327 = vld [vmem:[%s5 + $0x4] sm:$0xf]
    %v328 = vld [vmem:[%s5 + $0x8] sm:$0xf]
    %v329 = vld [vmem:[%s5 + $0xc] sm:$0xf]
    %v330 = vld [vmem:[%s5 + $0x10] sm:$0xf]
    %v331 = vld [vmem:[%s5 + $0x14] sm:$0xf]
    %v332 = vld [vmem:[%s5 + $0x18] sm:$0xf]
    %v333 = vld [vmem:[%s5 + $0x1c] sm:$0xf]
    %v334 = vld [vmem:[%s5 + $0x20] sm:$0xf]
    %v335 = vld [vmem:[%s5 + $0x24] sm:$0xf]
    %v336 = vld [vmem:[%s5 + $0x28] sm:$0xf]
    %v337 = vld [vmem:[%s5 + $0x2c] sm:$0xf]
    %v338 = vld [vmem:[%s5 + $0x30] sm:$0xf]
    %v339 = vld [vmem:[%s5 + $0x34] sm:$0xf]
    %v340 = vld [vmem:[%s5 + $0x38] sm:$0xf]
    %v341 = vld [vmem:[%s5 + $0x3c] sm:$0xf]
    %v342 = vld [vmem:[%s6] sm:$0x1]
    %v344 = vlaneseq
    %v345 = vshrl.u32 %v344, 7
    %v346 = vsub.s32 0, %v345
    %v347 = vrot.slane %v342, %v346
    %v365 = vunpack.c.l.b16 %v326
    %v366 = vunpack.c.l.b16 %v327
    %v367 = vunpack.c.l.b16 %v328
    %v368 = vunpack.c.l.b16 %v329
    %v369 = vunpack.c.l.b16 %v330
    %v370 = vunpack.c.l.b16 %v331
    %v371 = vunpack.c.l.b16 %v332
    %v372 = vunpack.c.l.b16 %v333
    %v373 = vunpack.c.l.b16 %v334
    %v374 = vunpack.c.l.b16 %v335
    %v375 = vunpack.c.l.b16 %v336
    %v376 = vunpack.c.l.b16 %v337
    %v377 = vunpack.c.l.b16 %v338
    %v378 = vunpack.c.l.b16 %v339
    %v379 = vunpack.c.l.b16 %v340
    %v380 = vunpack.c.l.b16 %v341
    %v381 = vpack.c.b16 %v366, %v365
    %v382 = vpack.c.b16 %v368, %v367
    %v383 = vpack.c.b16 %v370, %v369
    %v384 = vpack.c.b16 %v372, %v371
    %v385 = vpack.c.b16 %v374, %v373
    %v386 = vpack.c.b16 %v376, %v375
    %v387 = vpack.c.b16 %v378, %v377
    %v388 = vpack.c.b16 %v380, %v379
    %397 = vmatprep.subr.bf16.mxu0 0
    %398 = vmatpush1.bf16.msra.mxu0 %v381
    %399 = vmatprep.subr.bf16.mxu0 0
    %400 = vmatpush1.bf16.msra.mxu0 %v382
    %401 = vmatprep.subr.bf16.mxu0 0
    %402 = vmatpush1.bf16.msra.mxu0 %v383
    %403 = vmatprep.subr.bf16.mxu0 0
    %404 = vmatpush1.bf16.msra.mxu0 %v384
    %405 = vmatprep.subr.bf16.mxu0 0
    %406 = vmatpush1.bf16.msra.mxu0 %v385
    %407 = vmatprep.subr.bf16.mxu0 0
    %408 = vmatpush1.bf16.msra.mxu0 %v386
    %409 = vmatprep.subr.bf16.mxu0 0
    %410 = vmatpush1.bf16.msra.mxu0 %v387
    %411 = vmatprep.subr.bf16.mxu0 0
    %412 = vmatpush1.bf16.msra.mxu0 %v388
    %413 = vmatprep.subr.bf16.mxu0 0
    %414 = vmatpush1.bf16.msra.mxu0 0
    %415 = vmatprep.subr.bf16.mxu0 0
    %416 = vmatpush1.bf16.msra.mxu0 0
    %417 = vmatprep.subr.bf16.mxu0 0
    %418 = vmatpush1.bf16.msra.mxu0 0
    %419 = vmatprep.subr.bf16.mxu0 0
    %420 = vmatpush1.bf16.msra.mxu0 0
    %421 = vmatprep.subr.bf16.mxu0 0
    %422 = vmatpush1.bf16.msra.mxu0 0
    %423 = vmatprep.subr.bf16.mxu0 0
    %424 = vmatpush1.bf16.msra.mxu0 0
    %425 = vmatprep.subr.bf16.mxu0 0
    %426 = vmatpush1.bf16.msra.mxu0 0
    %427 = vmatprep.subr.bf16.mxu0 0
    %428 = vmatpush1.bf16.msra.mxu0 0
    %429 = vmatprep.mubr.bf16.mxu0 0
    %430 = vmatmul.mubr.bf16.gmra.mrb[0].mxu0 %v325
    %v431 = vpop.f32.mrb[0].mxu0
    %v432 = vadd.f32 %v347, %v431
    %v433 = vpop.f32.mrb[0].mxu0
    %v434 = vpop.f32.mrb[0].mxu0
    %v435 = vpop.f32.mrb[0].mxu0
    %436 = vdwg.mxu0
    %v437 = vmax.f32 %v432, 0.0
    %v438 = vpack.c.bf16 %v437, %v437
    %v439 = vld [vmem:[%s7] sm:$0xf]
    %v440 = vld [vmem:[%s7 + $0x4] sm:$0xf]
    %v441 = vld [vmem:[%s7 + $0x8] sm:$0xf]
    %v442 = vld [vmem:[%s7 + $0xc] sm:$0xf]
    %v443 = vld [vmem:[%s7 + $0x10] sm:$0xf]
    %v444 = vld [vmem:[%s7 + $0x14] sm:$0xf]
    %v445 = vld [vmem:[%s7 + $0x18] sm:$0xf]
    %v446 = vld [vmem:[%s7 + $0x1c] sm:$0xf]
    %v447 = vld [vmem:[%s7 + $0x20] sm:$0xf]
    %v448 = vld [vmem:[%s7 + $0x24] sm:$0xf]
    %v449 = vld [vmem:[%s7 + $0x28] sm:$0xf]
    %v450 = vld [vmem:[%s7 + $0x2c] sm:$0xf]
    %v451 = vld [vmem:[%s7 + $0x30] sm:$0xf]
    %v452 = vld [vmem:[%s7 + $0x34] sm:$0xf]
    %v453 = vld [vmem:[%s7 + $0x38] sm:$0xf]
    %v454 = vld [vmem:[%s7 + $0x3c] sm:$0xf]
    %v455 = vld [vmem:[%s8] sm:$0x1]
    %v457 = vlaneseq
    %v458 = vshrl.u32 %v457, 7
    %v459 = vsub.s32 0, %v458
    %v460 = vrot.slane %v455, %v459
    %v478 = vunpack.c.l.b16 %v439
    %v479 = vunpack.c.l.b16 %v440
    %v480 = vunpack.c.l.b16 %v441
    %v481 = vunpack.c.l.b16 %v442
    %v482 = vunpack.c.l.b16 %v443
    %v483 = vunpack.c.l.b16 %v444
    %v484 = vunpack.c.l.b16 %v445
    %v485 = vunpack.c.l.b16 %v446
    %v486 = vunpack.c.l.b16 %v447
    %v487 = vunpack.c.l.b16 %v448
    %v488 = vunpack.c.l.b16 %v449
    %v489 = vunpack.c.l.b16 %v450
    %v490 = vunpack.c.l.b16 %v451
    %v491 = vunpack.c.l.b16 %v452
    %v492 = vunpack.c.l.b16 %v453
    %v493 = vunpack.c.l.b16 %v454
    %v494 = vpack.c.b16 %v479, %v478
    %v495 = vpack.c.b16 %v481, %v480
    %v496 = vpack.c.b16 %v483, %v482
    %v497 = vpack.c.b16 %v485, %v484
    %v498 = vpack.c.b16 %v487, %v486
    %v499 = vpack.c.b16 %v489, %v488
    %v500 = vpack.c.b16 %v491, %v490
    %v501 = vpack.c.b16 %v493, %v492
    %510 = vmatprep.subr.bf16.mxu0 0
    %511 = vmatpush1.bf16.msra.mxu0 %v494
    %512 = vmatprep.subr.bf16.mxu0 0
    %513 = vmatpush1.bf16.msra.mxu0 %v495
    %514 = vmatprep.subr.bf16.mxu0 0
    %515 = vmatpush1.bf16.msra.mxu0 %v496
    %516 = vmatprep.subr.bf16.mxu0 0
    %517 = vmatpush1.bf16.msra.mxu0 %v497
    %518 = vmatprep.subr.bf16.mxu0 0
    %519 = vmatpush1.bf16.msra.mxu0 %v498
    %520 = vmatprep.subr.bf16.mxu0 0
    %521 = vmatpush1.bf16.msra.mxu0 %v499
    %522 = vmatprep.subr.bf16.mxu0 0
    %523 = vmatpush1.bf16.msra.mxu0 %v500
    %524 = vmatprep.subr.bf16.mxu0 0
    %525 = vmatpush1.bf16.msra.mxu0 %v501
    %526 = vmatprep.subr.bf16.mxu0 0
    %527 = vmatpush1.bf16.msra.mxu0 0
    %528 = vmatprep.subr.bf16.mxu0 0
    %529 = vmatpush1.bf16.msra.mxu0 0
    %530 = vmatprep.subr.bf16.mxu0 0
    %531 = vmatpush1.bf16.msra.mxu0 0
    %532 = vmatprep.subr.bf16.mxu0 0
    %533 = vmatpush1.bf16.msra.mxu0 0
    %534 = vmatprep.subr.bf16.mxu0 0
    %535 = vmatpush1.bf16.msra.mxu0 0
    %536 = vmatprep.subr.bf16.mxu0 0
    %537 = vmatpush1.bf16.msra.mxu0 0
    %538 = vmatprep.subr.bf16.mxu0 0
    %539 = vmatpush1.bf16.msra.mxu0 0
    %540 = vmatprep.subr.bf16.mxu0 0
    %541 = vmatpush1.bf16.msra.mxu0 0
    %542 = vmatprep.mubr.bf16.mxu0 0
    %543 = vmatmul.mubr.bf16.gmra.mrb[0].mxu0 %v438
    %v544 = vpop.f32.mrb[0].mxu0
    %v545 = vadd.f32 %v460, %v544
    %v546 = vpop.f32.mrb[0].mxu0
    %v547 = vpop.f32.mrb[0].mxu0
    %v548 = vpop.f32.mrb[0].mxu0
    %549 = vdwg.mxu0
    %vm550 = vcmask 130048
    %551 = vst.msk [vmem:[#allocation7] sm:$0xff] %vm550, %v545
    // Predicated region
    $region46: #{tpu_custom_call.1} parent=1 // pred_check
      _
    $region47: #{tpu_custom_call.1} parent=1 // pred_check_branch
      %553 = sbr.rel (0) target = $region49
    $region48: #{tpu_custom_call.1} parent=1 // pred_region
      %s555 = ssub.s32 128, 128
      %556 = vsyncadd [#allocation4], %s555
      %s558 = sshll.u32 [#allocation7], 4
      %s559 = int_to_ptr.vmem [resolvable:$true] %s558
      %561 = dma.vmem_to_hbm [thread:$0]  %s559, 128, %s9, [#allocation4]
    $region49: #{tpu_custom_call.1} parent=1 // pred_fallthru
      _
    // Predicated region
    $region50: #{tpu_custom_call.1} parent=1 // pred_check
      _
    $region51: #{tpu_custom_call.1} parent=1 // pred_check_branch
      %563 = sbr.rel (0) target = $region53
    $region52: #{tpu_custom_call.1} parent=1 // pred_region
      %564 = dma.done [#allocation4], 128
    $region53: #{tpu_custom_call.1} parent=1 // pred_fallthru
      _
    %565 = vsyncpa [#allocation3], 1
    %566 = vsyncpa [#allocation6], 1
    %567 = vsyncpa [#allocation4], 1

</llo_original>
